<compile_context>
chip_gen: v5e
topology: v5e:2x2
jax: 0.10.0
libtpu: 0.0.40
codegen_flags: <defaults>
</compile_context>

<pallas_src>
import numpy as np
import jax
import jax.numpy as jnp
from jax import lax
from jax.experimental import pallas as pl
from jax.experimental.pallas import tpu as pltpu

# ---------------------------------------------------------------------------
# Module configuration (fixed by the PyTorch module)
# ---------------------------------------------------------------------------
B = 2          # batch
C_IN = 4       # in_channels
T = 3          # temporal frames (forced by weight_edge_* second dim 75 = T*V)
V = 25         # num_point (forced by the ModuleList of 25 Linears)
DK = 8
DV = 8
NH = 2
DKH = DK // NH          # 4
DVH = DV // NH          # 4
TV = T * V              # 75
D_QKV = 2 * DK + DV     # 24
SCALE = DKH ** -0.5

# ---------------------------------------------------------------------------
# Static index math for torch's raw reinterpretation
#   qkv (B, V, T, 24).view(B, 24, T, V):  element [q, m] (m = t*V + v) of the
#   viewed (24, 75) matrix comes from raw flat position n = q*75 + m, i.e.
#   joint j, frame tt, per-joint-Linear output channel d below.
# ---------------------------------------------------------------------------
_n = np.arange(D_QKV * TV)
_J = _n // (T * D_QKV)                 # source joint
_TT = (_n % (T * D_QKV)) // D_QKV      # source frame
_D = _n % D_QKV                        # source Linear output channel
_GATHER_TV = (_TT * V + _J).reshape(D_QKV, TV)   # index into x's (T*V) axis


# ---------------------------------------------------------------------------
# Fused kernel: one batch element per grid step, channel-major / lane-dense
# ---------------------------------------------------------------------------
def _spatial_attention_kernel(xg_ref, wg_ref, bg_ref, wqk_ref, wv_ref, o_ref):
    # --- per-joint QKV projection, channel-major (24, TV=75 on lanes).
    #     Contraction is only over C=4 input channels -> VPU broadcast MACs. ---
    qkv = xg_ref[0] * wg_ref[0]
    for c in range(1, C_IN):
        qkv = qkv + xg_ref[c] * wg_ref[c]
    qkv = qkv + bg_ref[...]                     # (24, 75)

    ta_dims = (((0,), (0,)), ((), ()))   # contract dim0 of both: A^T . B
    tb_dims = (((1,), (1,)), ((), ()))   # contract dim1 of both: A . B^T (tiny B)

    for h in range(NH):                          # NH = 2, fully unrolled
        qw = qkv[DKH * h:DKH * (h + 1), :] * wqk_ref[h]           # (4,75) pre-scaled
        kh = qkv[DK + DKH * h:DK + DKH * (h + 1), :]              # (4,75)
        vh = qkv[2 * DK + DVH * h:2 * DK + DVH * (h + 1), :]      # (4,75)

        # logits[m, n] = sum_d qw[d, m] * kh[d, n]  -> only the tiny q operand
        # gets relayouted, never a 75x75 matrix.
        logits = lax.dot_general(qw, kh, ta_dims,
                                 preferred_element_type=jnp.float32)   # (75,75)
        mx = jnp.max(logits, axis=-1, keepdims=True)
        e = jnp.exp(logits - mx)
        denom = jnp.sum(e, axis=-1, keepdims=True)
        # exact reciprocal keeps the 1e-4 reference tolerance comfortable;
        # approx=True (EUP slot) is a possible micro-opt.
        w = e * pl.reciprocal(denom)                                    # (75,75)

        # ov[m, d] = sum_n w[m, n] * vh[d, n]: softmax matrix streams as the
        # NN LHS; only the tiny (4,75) v operand is relayouted.
        ov = lax.dot_general(w, vh, tb_dims,
                             preferred_element_type=jnp.float32)        # (75,4)
        o_ref[h] = (ov * wv_ref[h]).astype(o_ref.dtype)                 # weight_edge_v


# ---------------------------------------------------------------------------
# Params-only preparation: run ONCE (module init), not per call
# ---------------------------------------------------------------------------
def prepare_params(params):
    w_qkv, b_qkv = params["w_qkv"], params["b_qkv"]
    # scrambled per-joint projection weights, channel-major (C, 24, 75)
    wg = jnp.transpose(w_qkv[_J, :, _D], (1, 0)).reshape(C_IN, D_QKV, TV)
    bg = b_qkv[_J, 0, _D].reshape(D_QKV, TV)
    # edge weights: qk pre-transposed to channel-major AND pre-scaled by dkh^-0.5
    wqk = jnp.transpose(params["w_edge_qk"], (0, 2, 1)) * SCALE      # (NH, dkh, TV)
    wv = params["w_edge_v"]                                          # (NH, TV, dvh)
    return {"wg": wg, "bg": bg, "wqk": wqk, "wv": wv,
            "w_out": params["w_out"], "b_out": params["b_out"]}


# ---------------------------------------------------------------------------
# Forward pass: ONE fused pallas_call + tiny XLA epilogue
# ---------------------------------------------------------------------------
def spatial_attention_forward(x, prep):
    Bx, Cx, Tx, Vx = x.shape
    assert (Cx, Tx, Vx) == (C_IN, T, V)

    # per-call x gather implementing the qkv.view(N,-1,T,V) scramble
    x_cm = x.reshape(Bx, C_IN, TV)
    xg = jnp.take(x_cm, jnp.asarray(_GATHER_TV), axis=2)   # (B, C, 24, 75)

    out_heads = pl.pallas_call(
        _spatial_attention_kernel,
        out_shape=jax.ShapeDtypeStruct((Bx, NH, TV, DVH), x.dtype),
        grid=(Bx,),
        in_specs=[
            pl.BlockSpec((None, C_IN, D_QKV, TV), lambda b: (b, 0, 0, 0)),  # xg
            pl.BlockSpec((C_IN, D_QKV, TV), lambda b: (0, 0, 0)),           # wg
            pl.BlockSpec((D_QKV, TV), lambda b: (0, 0)),                    # bg
            pl.BlockSpec((NH, DKH, TV), lambda b: (0, 0, 0)),               # wqk
            pl.BlockSpec((NH, TV, DVH), lambda b: (0, 0, 0)),               # wv
        ],
        out_specs=pl.BlockSpec((None, NH, TV, DVH), lambda b: (b, 0, 0, 0)),
        compiler_params=pltpu.CompilerParams(
            dimension_semantics=("parallel",)),   # batch across v7x's 2 TCs;
        # constant-index weight blocks are reused across consecutive steps on
        # single-core chips and total <30 KB, so DMA cost is negligible.
    )(xg, prep["wg"], prep["bg"], prep["wqk"], prep["wv"])

    # --- tiny XLA epilogue: combine heads, torch .view scrambles, attn_out ---
    # combined[b, h*dvh+d, m] = out_heads[b, h, m, d]
    combined = jnp.transpose(out_heads, (0, 1, 3, 2)).reshape(Bx, DV, TV)
    viewed = combined.reshape(Bx, TV, DV)                   # raw .view(B, V*T, dv)
    final = viewed @ prep["w_out"] + prep["b_out"][0]       # Linear(dv -> C)
    return final.reshape(Bx, C_IN, Tx, Vx)                  # raw .view(B, C, T, V)


# ---------------------------------------------------------------------------
# Pure-JAX reference (mirrors the PyTorch forward literally)
# ---------------------------------------------------------------------------
def reference_forward(x, params):
    Bx, Cx, Tx, Vx = x.shape
    outs = []
    for j in range(Vx):
        xj = jnp.transpose(x[:, :, :, j], (0, 2, 1))           # (B, T, C)
        outs.append(xj @ params["w_qkv"][j] + params["b_qkv"][j, 0])
    qkv = jnp.stack(outs, axis=1)                              # (B, V, T, D)
    qkv = qkv.reshape(Bx, D_QKV, Tx, Vx)
    q, k, v = qkv[:, :DK], qkv[:, DK:2 * DK], qkv[:, 2 * DK:]
    q = q.reshape(Bx, NH, DKH, Tx, Vx) * DKH ** -0.5
    flat_q = q.reshape(Bx, NH, DKH, Tx * Vx)
    flat_k = k.reshape(Bx, NH, DKH, Tx * Vx)
    flat_v = v.reshape(Bx, NH, DVH, Tx * Vx)
    qw = jnp.transpose(flat_q, (0, 1, 3, 2)) * params["w_edge_qk"]
    logits = jnp.einsum("bhmd,bhdn->bhmn", qw, flat_k)
    weights = jax.nn.softmax(logits, axis=-1)
    attn = jnp.einsum("bhmn,bhnd->bhmd", weights,
                      jnp.transpose(flat_v, (0, 1, 3, 2))) * params["w_edge_v"]
    attn = attn.reshape(Bx, NH, Tx, Vx, DVH)
    attn = jnp.transpose(attn, (0, 1, 4, 2, 3))
    attn = attn.reshape(Bx, NH * DVH, Tx, Vx)
    attn = attn.reshape(Bx, Vx * Tx, -1)
    attn = attn @ params["w_out"] + params["b_out"][0]
    return attn.reshape(Bx, -1, Tx, Vx)


if __name__ == "__main__":
    key = jax.random.PRNGKey(0)
    k_x, k_w, k_b, k_qk, k_v, k_wo, k_bo = jax.random.split(key, 7)
    x = jax.random.normal(k_x, (B, C_IN, T, V), jnp.float32)
    params = {
        # 25 per-joint Linear(in_channels -> 2*dk+dv): stacked (V, C, D) + bias
        "w_qkv": jax.random.normal(k_w, (V, C_IN, D_QKV), jnp.float32) * 0.1,
        "b_qkv": jax.random.normal(k_b, (V, 1, D_QKV), jnp.float32) * 0.1,
        # weight_edge_qk: (Nh, 75, dk//Nh), weight_edge_v: (Nh, 75, dv//Nh)
        "w_edge_qk": jax.random.normal(k_qk, (NH, TV, DKH), jnp.float32),
        "w_edge_v": jax.random.normal(k_v, (NH, TV, DVH), jnp.float32),
        # attn_out: Linear(dv -> in_channels)
        "w_out": jax.random.normal(k_wo, (DV, C_IN), jnp.float32) * 0.1,
        "b_out": jax.random.normal(k_bo, (1, C_IN), jnp.float32) * 0.1,
    }

    # params-only transforms hoisted out of the per-call path (done once)
    prep = prepare_params(params)
    prep = jax.tree_util.tree_map(jax.block_until_ready, prep)

    fwd = jax.jit(spatial_attention_forward)
    out = fwd(x, prep)
    out = jax.block_until_ready(out)

    ref = reference_forward(x, params)
    np.testing.assert_allclose(np.asarray(out), np.asarray(ref),
                               rtol=1e-4, atol=1e-4)
    assert out.shape == (B, C_IN, T, V)
    # TODO(synk): drop_connect (torch.bernoulli mask) is training-only and the
    # adjacency / relative branches are disabled in this configuration.
    print("KERNEL_OK")
</pallas_src>

<mosaic_0001>
module attributes {stable_mosaic.version = 11 : i64} {
  func.func @_spatial_attention_kernel(%arg0: i32, %arg1: memref<1x4x24x75xf32, #tpu.memory_space<vmem>>, %arg2: memref<4x24x75xf32, #tpu.memory_space<vmem>>, %arg3: memref<24x75xf32, #tpu.memory_space<vmem>>, %arg4: memref<2x4x75xf32, #tpu.memory_space<vmem>>, %arg5: memref<2x75x4xf32, #tpu.memory_space<vmem>>, %arg6: memref<1x2x75x4xf32, #tpu.memory_space<vmem>>) attributes {dimension_semantics = [#tpu.dimension_semantics<parallel>], iteration_bounds = array<i64: 2>, scalar_prefetch = 0 : i64, scratch_operands = 0 : i64, tpu.core_type = #tpu.core_type<tc>, window_params = [{transform_indices = @transform_0, window_bounds = array<i64: 1, 4, 24, 75>}, {pipeline_mode = #tpu.pipeline_mode<synchronous>, transform_indices = @transform_1, window_bounds = array<i64: 4, 24, 75>}, {pipeline_mode = #tpu.pipeline_mode<synchronous>, transform_indices = @transform_2, window_bounds = array<i64: 24, 75>}, {pipeline_mode = #tpu.pipeline_mode<synchronous>, transform_indices = @transform_3, window_bounds = array<i64: 2, 4, 75>}, {pipeline_mode = #tpu.pipeline_mode<synchronous>, transform_indices = @transform_4, window_bounds = array<i64: 2, 75, 4>}, {transform_indices = @transform_5, window_bounds = array<i64: 1, 2, 75, 4>}]} {
    %c0 = arith.constant 0 : index
    %c0_0 = arith.constant 0 : index
    %c0_1 = arith.constant 0 : index
    %c0_2 = arith.constant 0 : index
    %0 = vector.load %arg1[%c0, %c0_0, %c0_1, %c0_2] : memref<1x4x24x75xf32, #tpu.memory_space<vmem>>, vector<1x1x24x75xf32>
    %1 = vector.shape_cast %0 : vector<1x1x24x75xf32> to vector<24x75xf32>
    %c0_3 = arith.constant 0 : index
    %c0_4 = arith.constant 0 : index
    %c0_5 = arith.constant 0 : index
    %2 = vector.load %arg2[%c0_3, %c0_4, %c0_5] : memref<4x24x75xf32, #tpu.memory_space<vmem>>, vector<1x24x75xf32>
    %3 = vector.shape_cast %2 : vector<1x24x75xf32> to vector<24x75xf32>
    %4 = arith.mulf %1, %3 : vector<24x75xf32>
    %c0_6 = arith.constant 0 : index
    %c1 = arith.constant 1 : index
    %c0_7 = arith.constant 0 : index
    %c0_8 = arith.constant 0 : index
    %5 = vector.load %arg1[%c0_6, %c1, %c0_7, %c0_8] : memref<1x4x24x75xf32, #tpu.memory_space<vmem>>, vector<1x1x24x75xf32>
    %6 = vector.shape_cast %5 : vector<1x1x24x75xf32> to vector<24x75xf32>
    %c1_9 = arith.constant 1 : index
    %c0_10 = arith.constant 0 : index
    %c0_11 = arith.constant 0 : index
    %7 = vector.load %arg2[%c1_9, %c0_10, %c0_11] : memref<4x24x75xf32, #tpu.memory_space<vmem>>, vector<1x24x75xf32>
    %8 = vector.shape_cast %7 : vector<1x24x75xf32> to vector<24x75xf32>
    %9 = arith.mulf %6, %8 : vector<24x75xf32>
    %10 = arith.addf %4, %9 : vector<24x75xf32>
    %c0_12 = arith.constant 0 : index
    %c2 = arith.constant 2 : index
    %c0_13 = arith.constant 0 : index
    %c0_14 = arith.constant 0 : index
    %11 = vector.load %arg1[%c0_12, %c2, %c0_13, %c0_14] : memref<1x4x24x75xf32, #tpu.memory_space<vmem>>, vector<1x1x24x75xf32>
    %12 = vector.shape_cast %11 : vector<1x1x24x75xf32> to vector<24x75xf32>
    %c2_15 = arith.constant 2 : index
    %c0_16 = arith.constant 0 : index
    %c0_17 = arith.constant 0 : index
    %13 = vector.load %arg2[%c2_15, %c0_16, %c0_17] : memref<4x24x75xf32, #tpu.memory_space<vmem>>, vector<1x24x75xf32>
    %14 = vector.shape_cast %13 : vector<1x24x75xf32> to vector<24x75xf32>
    %15 = arith.mulf %12, %14 : vector<24x75xf32>
    %16 = arith.addf %10, %15 : vector<24x75xf32>
    %c0_18 = arith.constant 0 : index
    %c3 = arith.constant 3 : index
    %c0_19 = arith.constant 0 : index
    %c0_20 = arith.constant 0 : index
    %17 = vector.load %arg1[%c0_18, %c3, %c0_19, %c0_20] : memref<1x4x24x75xf32, #tpu.memory_space<vmem>>, vector<1x1x24x75xf32>
    %18 = vector.shape_cast %17 : vector<1x1x24x75xf32> to vector<24x75xf32>
    %c3_21 = arith.constant 3 : index
    %c0_22 = arith.constant 0 : index
    %c0_23 = arith.constant 0 : index
    %19 = vector.load %arg2[%c3_21, %c0_22, %c0_23] : memref<4x24x75xf32, #tpu.memory_space<vmem>>, vector<1x24x75xf32>
    %20 = vector.shape_cast %19 : vector<1x24x75xf32> to vector<24x75xf32>
    %21 = arith.mulf %18, %20 : vector<24x75xf32>
    %22 = arith.addf %16, %21 : vector<24x75xf32>
    %c0_24 = arith.constant 0 : index
    %c0_25 = arith.constant 0 : index
    %23 = vector.load %arg3[%c0_24, %c0_25] : memref<24x75xf32, #tpu.memory_space<vmem>>, vector<24x75xf32>
    %24 = arith.addf %22, %23 : vector<24x75xf32>
    %25 = vector.extract_strided_slice %24 {offsets = [0, 0], sizes = [4, 75], strides = [1, 1]} : vector<24x75xf32> to vector<4x75xf32>
    %c0_26 = arith.constant 0 : index
    %c0_27 = arith.constant 0 : index
    %c0_28 = arith.constant 0 : index
    %26 = vector.load %arg4[%c0_26, %c0_27, %c0_28] : memref<2x4x75xf32, #tpu.memory_space<vmem>>, vector<1x4x75xf32>
    %27 = vector.shape_cast %26 : vector<1x4x75xf32> to vector<4x75xf32>
    %28 = arith.mulf %25, %27 : vector<4x75xf32>
    %29 = vector.extract_strided_slice %24 {offsets = [8, 0], sizes = [4, 75], strides = [1, 1]} : vector<24x75xf32> to vector<4x75xf32>
    %30 = vector.extract_strided_slice %24 {offsets = [16, 0], sizes = [4, 75], strides = [1, 1]} : vector<24x75xf32> to vector<4x75xf32>
    %cst = arith.constant dense<0.000000e+00> : vector<75x75xf32>
    %31 = tpu.matmul %28, %29, %cst {dimension_numbers = #tpu.dot_dimension_numbers<[0], [0], [1], [1], [0, 1, 1, 1], [], []>} : vector<4x75xf32>, vector<4x75xf32>, vector<75x75xf32> -> vector<75x75xf32>
    %cst_29 = arith.constant dense<0xFF800000> : vector<75xf32>
    %32 = vector.multi_reduction <maximumf>, %31, %cst_29 [1] : vector<75x75xf32> to vector<75xf32>
    %33 = vector.shape_cast %32 : vector<75xf32> to vector<75x1xf32>
    %34 = vector.broadcast %33 : vector<75x1xf32> to vector<75x75xf32>
    %35 = arith.subf %31, %34 : vector<75x75xf32>
    %36 = math.exp %35 : vector<75x75xf32>
    %cst_30 = arith.constant dense<0.000000e+00> : vector<75xf32>
    %37 = vector.multi_reduction <add>, %36, %cst_30 [1] : vector<75x75xf32> to vector<75xf32>
    %38 = vector.shape_cast %37 : vector<75xf32> to vector<75x1xf32>
    %39 = tpu.reciprocal %38 : vector<75x1xf32> -> vector<75x1xf32>
    %40 = vector.broadcast %39 : vector<75x1xf32> to vector<75x75xf32>
    %41 = arith.mulf %36, %40 : vector<75x75xf32>
    %cst_31 = arith.constant dense<0.000000e+00> : vector<75x4xf32>
    %42 = tpu.matmul %41, %30, %cst_31 {dimension_numbers = #tpu.dot_dimension_numbers<[1], [1], [0], [0], [0, 0, 1, 0], [], []>} : vector<75x75xf32>, vector<4x75xf32>, vector<75x4xf32> -> vector<75x4xf32>
    %c0_32 = arith.constant 0 : index
    %c0_33 = arith.constant 0 : index
    %c0_34 = arith.constant 0 : index
    %43 = vector.load %arg5[%c0_32, %c0_33, %c0_34] : memref<2x75x4xf32, #tpu.memory_space<vmem>>, vector<1x75x4xf32>
    %44 = vector.shape_cast %43 : vector<1x75x4xf32> to vector<75x4xf32>
    %45 = arith.mulf %42, %44 : vector<75x4xf32>
    %c0_35 = arith.constant 0 : index
    %c0_36 = arith.constant 0 : index
    %c0_37 = arith.constant 0 : index
    %c0_38 = arith.constant 0 : index
    %46 = vector.load %arg6[%c0_35, %c0_36, %c0_37, %c0_38] : memref<1x2x75x4xf32, #tpu.memory_space<vmem>>, vector<1x1x75x4xf32>
    %47 = vector.shape_cast %46 : vector<1x1x75x4xf32> to vector<75x4xf32>
    %48 = vector.shape_cast %45 : vector<75x4xf32> to vector<1x1x75x4xf32>
    tpu.vector_store %arg6[%c0_35, %c0_36, %c0_37, %c0_38], %48 {strides = array<i32>} : memref<1x2x75x4xf32, #tpu.memory_space<vmem>>, vector<1x1x75x4xf32>,
    %49 = vector.extract_strided_slice %24 {offsets = [4, 0], sizes = [4, 75], strides = [1, 1]} : vector<24x75xf32> to vector<4x75xf32>
    %c1_39 = arith.constant 1 : index
    %c0_40 = arith.constant 0 : index
    %c0_41 = arith.constant 0 : index
    %50 = vector.load %arg4[%c1_39, %c0_40, %c0_41] : memref<2x4x75xf32, #tpu.memory_space<vmem>>, vector<1x4x75xf32>
    %51 = vector.shape_cast %50 : vector<1x4x75xf32> to vector<4x75xf32>
    %52 = arith.mulf %49, %51 : vector<4x75xf32>
    %53 = vector.extract_strided_slice %24 {offsets = [12, 0], sizes = [4, 75], strides = [1, 1]} : vector<24x75xf32> to vector<4x75xf32>
    %54 = vector.extract_strided_slice %24 {offsets = [20, 0], sizes = [4, 75], strides = [1, 1]} : vector<24x75xf32> to vector<4x75xf32>
    %cst_42 = arith.constant dense<0.000000e+00> : vector<75x75xf32>
    %55 = tpu.matmul %52, %53, %cst_42 {dimension_numbers = #tpu.dot_dimension_numbers<[0], [0], [1], [1], [0, 1, 1, 1], [], []>} : vector<4x75xf32>, vector<4x75xf32>, vector<75x75xf32> -> vector<75x75xf32>
    %cst_43 = arith.constant dense<0xFF800000> : vector<75xf32>
    %56 = vector.multi_reduction <maximumf>, %55, %cst_43 [1] : vector<75x75xf32> to vector<75xf32>
    %57 = vector.shape_cast %56 : vector<75xf32> to vector<75x1xf32>
    %58 = vector.broadcast %57 : vector<75x1xf32> to vector<75x75xf32>
    %59 = arith.subf %55, %58 : vector<75x75xf32>
    %60 = math.exp %59 : vector<75x75xf32>
    %cst_44 = arith.constant dense<0.000000e+00> : vector<75xf32>
    %61 = vector.multi_reduction <add>, %60, %cst_44 [1] : vector<75x75xf32> to vector<75xf32>
    %62 = vector.shape_cast %61 : vector<75xf32> to vector<75x1xf32>
    %63 = tpu.reciprocal %62 : vector<75x1xf32> -> vector<75x1xf32>
    %64 = vector.broadcast %63 : vector<75x1xf32> to vector<75x75xf32>
    %65 = arith.mulf %60, %64 : vector<75x75xf32>
    %cst_45 = arith.constant dense<0.000000e+00> : vector<75x4xf32>
    %66 = tpu.matmul %65, %54, %cst_45 {dimension_numbers = #tpu.dot_dimension_numbers<[1], [1], [0], [0], [0, 0, 1, 0], [], []>} : vector<75x75xf32>, vector<4x75xf32>, vector<75x4xf32> -> vector<75x4xf32>
    %c1_46 = arith.constant 1 : index
    %c0_47 = arith.constant 0 : index
    %c0_48 = arith.constant 0 : index
    %67 = vector.load %arg5[%c1_46, %c0_47, %c0_48] : memref<2x75x4xf32, #tpu.memory_space<vmem>>, vector<1x75x4xf32>
    %68 = vector.shape_cast %67 : vector<1x75x4xf32> to vector<75x4xf32>
    %69 = arith.mulf %66, %68 : vector<75x4xf32>
    %c0_49 = arith.constant 0 : index
    %c1_50 = arith.constant 1 : index
    %c0_51 = arith.constant 0 : index
    %c0_52 = arith.constant 0 : index
    %70 = vector.load %arg6[%c0_49, %c1_50, %c0_51, %c0_52] : memref<1x2x75x4xf32, #tpu.memory_space<vmem>>, vector<1x1x75x4xf32>
    %71 = vector.shape_cast %70 : vector<1x1x75x4xf32> to vector<75x4xf32>
    %72 = vector.shape_cast %69 : vector<75x4xf32> to vector<1x1x75x4xf32>
    tpu.vector_store %arg6[%c0_49, %c1_50, %c0_51, %c0_52], %72 {strides = array<i32>} : memref<1x2x75x4xf32, #tpu.memory_space<vmem>>, vector<1x1x75x4xf32>,
    return
  }
  func.func @transform_0(%arg0: i32) -> (i32, i32, i32, i32) {
    %c0_i32 = arith.constant 0 : i32
    %c0_i32_0 = arith.constant 0 : i32
    %c0_i32_1 = arith.constant 0 : i32
    %c0_i32_2 = arith.constant 0 : i32
    return %arg0, %c0_i32, %c0_i32_0, %c0_i32_1 : i32, i32, i32, i32
  }
  func.func @transform_1(%arg0: i32) -> (i32, i32, i32) {
    %c0_i32 = arith.constant 0 : i32
    %c0_i32_0 = arith.constant 0 : i32
    %c0_i32_1 = arith.constant 0 : i32
    %c0_i32_2 = arith.constant 0 : i32
    return %c0_i32, %c0_i32_0, %c0_i32_1 : i32, i32, i32
  }
  func.func @transform_2(%arg0: i32) -> (i32, i32) {
    %c0_i32 = arith.constant 0 : i32
    %c0_i32_0 = arith.constant 0 : i32
    %c0_i32_1 = arith.constant 0 : i32
    return %c0_i32, %c0_i32_0 : i32, i32
  }
  func.func @transform_3(%arg0: i32) -> (i32, i32, i32) {
    %c0_i32 = arith.constant 0 : i32
    %c0_i32_0 = arith.constant 0 : i32
    %c0_i32_1 = arith.constant 0 : i32
    %c0_i32_2 = arith.constant 0 : i32
    return %c0_i32, %c0_i32_0, %c0_i32_1 : i32, i32, i32
  }
  func.func @transform_4(%arg0: i32) -> (i32, i32, i32) {
    %c0_i32 = arith.constant 0 : i32
    %c0_i32_0 = arith.constant 0 : i32
    %c0_i32_1 = arith.constant 0 : i32
    %c0_i32_2 = arith.constant 0 : i32
    return %c0_i32, %c0_i32_0, %c0_i32_1 : i32, i32, i32
  }
  func.func @transform_5(%arg0: i32) -> (i32, i32, i32, i32) {
    %c0_i32 = arith.constant 0 : i32
    %c0_i32_0 = arith.constant 0 : i32
    %c0_i32_1 = arith.constant 0 : i32
    %c0_i32_2 = arith.constant 0 : i32
    return %arg0, %c0_i32, %c0_i32_0, %c0_i32_1 : i32, i32, i32, i32
  }
}

</mosaic_0001>

<llo_original>
// kernel: spatial_attention_forward.1
$region0: #{spatial_attention_forward.1}
  #allocation0 [shape = 'u32[]', space=smem, size = 0x4, offset = 0x4, fixed_abs, tag = 'smem constant byte address 0x4 - core index']
  #allocation1 [shape = 'u32[72,128]{1,0:T(1,128)}', space=vmem, size = 0x9000, scoped, tag = 'internal scratch']
  %s0 = inlined_call_operand.vmem [shape: f32[2,4,24,75], index: 0, kind: input, shape index: {}]
  %s1 = inlined_call_operand.vmem [shape: f32[4,24,75], index: 1, kind: input, shape index: {}]
  %s2 = inlined_call_operand.vmem [shape: f32[24,75], index: 2, kind: input, shape index: {}]
  %s3 = inlined_call_operand.vmem [shape: f32[2,4,75], index: 3, kind: input, shape index: {}]
  %s4 = inlined_call_operand.vmem [shape: f32[2,75,4], index: 4, kind: input, shape index: {}]
  %s5 = inlined_call_operand.vmem [shape: f32[2,2,75,4], index: 5, kind: output, shape index: {}]
  %s6 = sld [smem:[#allocation0]]
  $region53: #{spatial_attention_forward.1} parent=0
    _
  %s8 = ssub.s32 1, %s6
  %s9 = scalar_select 0, %s8, %s6
  loop: start=0, step=1, limit=4
  $region2: #{spatial_attention_forward.1} parent=0 // loop_pre_header
    _
  $region3: #{spatial_attention_forward.1} parent=0 // loop_header
    %s11 = sphi 0, %s15
    %p12 = scmp.ge.s32.totalorder %s11, 4
    %s21 = sphi 0, %s23
    %s24 = sphi 0, %s21
    %s25 = sphi 0, %s24
    %s41 = sphi 0, %s25
    %s45 = sphi 0, %s45
    %s47 = sphi 0, %s45
    %s48 = sphi 0, %s47
    %s62 = sphi 0, %s48
    %s66 = sphi 0, %s66
    %s68 = sphi 0, %s66
    %s69 = sphi 0, %s68
    %s83 = sphi 0, %s69
    %s87 = sphi 0, %s87
    %s89 = sphi 0, %s87
    %s90 = sphi 0, %s89
    %s104 = sphi 0, %s90
    %s108 = sphi 0, %s108
    %s110 = sphi 0, %s108
    %s111 = sphi 0, %s110
    %s125 = sphi 0, %s111
    %s131 = sphi 0, %s133
    %s134 = sphi 0, %s131
    %s135 = sphi 0, %s134
    %s151 = sphi 0, %s135
  $region4: #{spatial_attention_forward.1} parent=0 // loop_header_branch
    %14 = sbr.rel (%p12) target = $region8
  $region5: #{spatial_attention_forward.1} parent=0 // loop_body
    %s16 = ssub.s32 %s11, 1
    %s17 = ssub.s32 %s11, 2
    %s18 = sadd.s32 %s11, 1
    %s19 = ssub.s32 %s11, %s18
    %p20 = scmp.eq.s32.totalorder %s19, 0
    %s22 = sadd.s32 %s21, 1
    %s23 = scalar_select %p20, %s21, %s22
    %p26 = pneg %p20
    %p27 = scmp.eq.s32.totalorder %s11, 1
    %p28 = por %p26, %p27
    %p29 = scmp.ne.s32.totalorder %s21, %s24
    %p30 = scmp.eq.s32.totalorder %s11, 0
    %p31 = por %p29, %p30
    %p32 = scmp.ne.s32.totalorder %s21, %s24
    %p33 = scmp.eq.s32.totalorder %s16, 1
    %p34 = por %p32, %p33
    %p35 = scmp.ne.s32.totalorder %s24, %s25
    %p36 = scmp.eq.s32.totalorder %s16, 0
    %p37 = por %p35, %p36
    %p38 = scmp.ne.s32.totalorder %s24, %s25
    %p39 = scmp.eq.s32.totalorder %s17, 1
    %p40 = por %p38, %p39
    %p42 = scmp.ne.s32.totalorder %s25, %s41
    %p43 = scmp.eq.s32.totalorder %s17, 0
    %p44 = por %p42, %p43
    %s46 = sadd.s32 %s45, 1
    %p49 = scmp.eq.s32.totalorder %s11, 1
    %p50 = scmp.ne.s32.totalorder %s45, %s47
    %p51 = scmp.eq.s32.totalorder %s11, 0
    %p52 = por %p50, %p51
    %p53 = scmp.ne.s32.totalorder %s45, %s47
    %p54 = scmp.eq.s32.totalorder %s16, 1
    %p55 = por %p53, %p54
    %p56 = scmp.ne.s32.totalorder %s47, %s48
    %p57 = scmp.eq.s32.totalorder %s16, 0
    %p58 = por %p56, %p57
    %p59 = scmp.ne.s32.totalorder %s47, %s48
    %p60 = scmp.eq.s32.totalorder %s17, 1
    %p61 = por %p59, %p60
    %p63 = scmp.ne.s32.totalorder %s48, %s62
    %p64 = scmp.eq.s32.totalorder %s17, 0
    %p65 = por %p63, %p64
    %s67 = sadd.s32 %s66, 1
    %p70 = scmp.eq.s32.totalorder %s11, 1
    %p71 = scmp.ne.s32.totalorder %s66, %s68
    %p72 = scmp.eq.s32.totalorder %s11, 0
    %p73 = por %p71, %p72
    %p74 = scmp.ne.s32.totalorder %s66, %s68
    %p75 = scmp.eq.s32.totalorder %s16, 1
    %p76 = por %p74, %p75
    %p77 = scmp.ne.s32.totalorder %s68, %s69
    %p78 = scmp.eq.s32.totalorder %s16, 0
    %p79 = por %p77, %p78
    %p80 = scmp.ne.s32.totalorder %s68, %s69
    %p81 = scmp.eq.s32.totalorder %s17, 1
    %p82 = por %p80, %p81
    %p84 = scmp.ne.s32.totalorder %s69, %s83
    %p85 = scmp.eq.s32.totalorder %s17, 0
    %p86 = por %p84, %p85
    %s88 = sadd.s32 %s87, 1
    %p91 = scmp.eq.s32.totalorder %s11, 1
    %p92 = scmp.ne.s32.totalorder %s87, %s89
    %p93 = scmp.eq.s32.totalorder %s11, 0
    %p94 = por %p92, %p93
    %p95 = scmp.ne.s32.totalorder %s87, %s89
    %p96 = scmp.eq.s32.totalorder %s16, 1
    %p97 = por %p95, %p96
    %p98 = scmp.ne.s32.totalorder %s89, %s90
    %p99 = scmp.eq.s32.totalorder %s16, 0
    %p100 = por %p98, %p99
    %p101 = scmp.ne.s32.totalorder %s89, %s90
    %p102 = scmp.eq.s32.totalorder %s17, 1
    %p103 = por %p101, %p102
    %p105 = scmp.ne.s32.totalorder %s90, %s104
    %p106 = scmp.eq.s32.totalorder %s17, 0
    %p107 = por %p105, %p106
    %s109 = sadd.s32 %s108, 1
    %p112 = scmp.eq.s32.totalorder %s11, 1
    %p113 = scmp.ne.s32.totalorder %s108, %s110
    %p114 = scmp.eq.s32.totalorder %s11, 0
    %p115 = por %p113, %p114
    %p116 = scmp.ne.s32.totalorder %s108, %s110
    %p117 = scmp.eq.s32.totalorder %s16, 1
    %p118 = por %p116, %p117
    %p119 = scmp.ne.s32.totalorder %s110, %s111
    %p120 = scmp.eq.s32.totalorder %s16, 0
    %p121 = por %p119, %p120
    %p122 = scmp.ne.s32.totalorder %s110, %s111
    %p123 = scmp.eq.s32.totalorder %s17, 1
    %p124 = por %p122, %p123
    %p126 = scmp.ne.s32.totalorder %s111, %s125
    %p127 = scmp.eq.s32.totalorder %s17, 0
    %p128 = por %p126, %p127
    %s129 = ssub.s32 %s11, %s18
    %p130 = scmp.eq.s32.totalorder %s129, 0
    %s132 = sadd.s32 %s131, 1
    %s133 = scalar_select %p130, %s131, %s132
    %p136 = pneg %p130
    %p137 = scmp.eq.s32.totalorder %s11, 1
    %p138 = por %p136, %p137
    %p139 = scmp.ne.s32.totalorder %s131, %s134
    %p140 = scmp.eq.s32.totalorder %s11, 0
    %p141 = por %p139, %p140
    %p142 = scmp.ne.s32.totalorder %s131, %s134
    %p143 = scmp.eq.s32.totalorder %s16, 1
    %p144 = por %p142, %p143
    %p145 = scmp.ne.s32.totalorder %s134, %s135
    %p146 = scmp.eq.s32.totalorder %s16, 0
    %p147 = por %p145, %p146
    %p148 = scmp.ne.s32.totalorder %s134, %s135
    %p149 = scmp.eq.s32.totalorder %s17, 1
    %p150 = por %p148, %p149
    %p152 = scmp.ne.s32.totalorder %s135, %s151
    %p153 = scmp.eq.s32.totalorder %s17, 0
    %p154 = por %p152, %p153
    %p155 = scmp.le.s32.totalorder 1, %s11
    %p156 = scmp.lt.s32.totalorder %s11, 3
    %p157 = pnand %p155, %p156
    %p158 = pneg %p157
    // Predicated region
    $region9: #{spatial_attention_forward.1} parent=5 // pred_check
      _
    $region10: #{spatial_attention_forward.1} parent=5 // pred_check_branch
      %160 = sbr.rel (%p157) target = $region12
    $region11: #{spatial_attention_forward.1} parent=5 // pred_region
      %s161 = ssub.s32 %s11, 1
      // Predicated region
      $region13: #{spatial_attention_forward.1} parent=11 // pred_check
        %p162 = pneg %p58
      $region14: #{spatial_attention_forward.1} parent=11 // pred_check_branch
        %164 = sbr.rel (%p162) target = $region16
      $region15: #{spatial_attention_forward.1} parent=11 // pred_region
        _
      $region16: #{spatial_attention_forward.1} parent=11 // pred_fallthru
        _
      // Predicated region
      $region17: #{spatial_attention_forward.1} parent=11 // pred_check
        %p165 = pneg %p79
      $region18: #{spatial_attention_forward.1} parent=11 // pred_check_branch
        %167 = sbr.rel (%p165) target = $region20
      $region19: #{spatial_attention_forward.1} parent=11 // pred_region
        _
      $region20: #{spatial_attention_forward.1} parent=11 // pred_fallthru
        _
      // Predicated region
      $region21: #{spatial_attention_forward.1} parent=11 // pred_check
        %p168 = pneg %p100
      $region22: #{spatial_attention_forward.1} parent=11 // pred_check_branch
        %170 = sbr.rel (%p168) target = $region24
      $region23: #{spatial_attention_forward.1} parent=11 // pred_region
        _
      $region24: #{spatial_attention_forward.1} parent=11 // pred_fallthru
        _
      // Predicated region
      $region25: #{spatial_attention_forward.1} parent=11 // pred_check
        %p171 = pneg %p121
      $region26: #{spatial_attention_forward.1} parent=11 // pred_check_branch
        %173 = sbr.rel (%p171) target = $region28
      $region27: #{spatial_attention_forward.1} parent=11 // pred_region
        _
      $region28: #{spatial_attention_forward.1} parent=11 // pred_fallthru
        _
    $region12: #{spatial_attention_forward.1} parent=5 // pred_fallthru
      _
    %p174 = scmp.lt.s32.totalorder %s11, 2
    // Predicated region
    $region29: #{spatial_attention_forward.1} parent=5 // pred_check
      %p175 = pneg %p174
    $region30: #{spatial_attention_forward.1} parent=5 // pred_check_branch
      %177 = sbr.rel (%p175) target = $region32
    $region31: #{spatial_attention_forward.1} parent=5 // pred_region
      // Predicated region
      $region33: #{spatial_attention_forward.1} parent=31 // pred_check
        %p178 = pneg %p31
      $region34: #{spatial_attention_forward.1} parent=31 // pred_check_branch
        %180 = sbr.rel (%p178) target = $region36
      $region35: #{spatial_attention_forward.1} parent=31 // pred_region
        %p181 = scmp.lt.s32.totalorder %s11, 1
        %s182 = scalar_select %p181, %s11, 1
        %s183 = smul.addr %s182, 12
        %s184 = smul.addr %s183, 8
        %s185 = scalar_lea.vmem %s0, %s184
      $region36: #{spatial_attention_forward.1} parent=31 // pred_fallthru
        _
    $region32: #{spatial_attention_forward.1} parent=5 // pred_fallthru
      _
    %p186 = scmp.le.s32.totalorder 1, %s11
    %p187 = scmp.lt.s32.totalorder %s11, 3
    %p188 = pnand %p186, %p187
    %p189 = pneg %p188
    // Predicated region
    $region37: #{spatial_attention_forward.1} parent=5 // pred_check
      _
    $region38: #{spatial_attention_forward.1} parent=5 // pred_check_branch
      %191 = sbr.rel (%p188) target = $region40
    $region39: #{spatial_attention_forward.1} parent=5 // pred_region
      %s192 = ssub.s32 %s11, 1
      %p193 = scmp.lt.s32.totalorder %s16, 1
      %s194 = scalar_select %p193, %s16, 1
      %s195 = smul.addr %s194, 12
      %s196 = smul.addr %s195, 8
      %s197 = scalar_lea.vmem %s0, %s196
      %p198 = pneg %p37
      %p199 = pneg %p34
      %p200 = pneg %p58
      %p201 = pneg %p55
      %p202 = pneg %p79
      %p203 = pneg %p76
      %p204 = pneg %p100
      %p205 = pneg %p97
      %p206 = pneg %p121
      %p207 = pneg %p118
      %p208 = pneg %p147
      %p209 = pneg %p144
      %p210 = scmp.lt.s32.totalorder %s16, 1
      %s211 = scalar_select %p210, %s16, 1
      %s212 = smul.addr %s211, 20
      %s213 = smul.addr %s212, 8
      %s214 = scalar_lea.vmem %s5, %s213
      %p215 = scmp.lt.s32.totalorder %s16, 1
      %s216 = scalar_select %p215, %s16, 1
      %s217 = smul.addr %s216, 12
      %s218 = smul.addr %s217, 8
      %s219 = scalar_lea.vmem %s0, %s218
      %p220 = scmp.lt.s32.totalorder %s16, 1
      %s221 = scalar_select %p220, %s16, 1
      %s222 = smul.addr %s221, 20
      %s223 = smul.addr %s222, 8
      %s224 = scalar_lea.vmem %s5, %s223
      %v225 = vld [vmem:[%s219] sm:$0xff]
      %v226 = vld [vmem:[%s219 + $0x8] sm:$0xff]
      %v227 = vld [vmem:[%s219 + $0x10] sm:$0xff]
      %v228 = vld [vmem:[%s1] sm:$0xff]
      %v229 = vld [vmem:[%s1 + $0x8] sm:$0xff]
      %v230 = vld [vmem:[%s1 + $0x10] sm:$0xff]
      %v231 = vmul.f32 %v225, %v228
      %v232 = vmul.f32 %v226, %v229
      %v233 = vmul.f32 %v227, %v230
      %s234 = scalar_lea.vmem %s219, 24
      %v235 = vld [vmem:[%s234] sm:$0xff]
      %v236 = vld [vmem:[%s234 + $0x8] sm:$0xff]
      %v237 = vld [vmem:[%s234 + $0x10] sm:$0xff]
      %s238 = scalar_lea.vmem %s1, 24
      %v239 = vld [vmem:[%s238] sm:$0xff]
      %v240 = vld [vmem:[%s238 + $0x8] sm:$0xff]
      %v241 = vld [vmem:[%s238 + $0x10] sm:$0xff]
      %v242 = vmul.f32 %v235, %v239
      %v243 = vmul.f32 %v236, %v240
      %v244 = vmul.f32 %v237, %v241
      %v245 = vadd.f32 %v231, %v242
      %v246 = vadd.f32 %v232, %v243
      %v247 = vadd.f32 %v233, %v244
      %s248 = scalar_lea.vmem %s219, 48
      %v249 = vld [vmem:[%s248] sm:$0xff]
      %v250 = vld [vmem:[%s248 + $0x8] sm:$0xff]
      %v251 = vld [vmem:[%s248 + $0x10] sm:$0xff]
      %s252 = scalar_lea.vmem %s1, 48
      %v253 = vld [vmem:[%s252] sm:$0xff]
      %v254 = vld [vmem:[%s252 + $0x8] sm:$0xff]
      %v255 = vld [vmem:[%s252 + $0x10] sm:$0xff]
      %v256 = vmul.f32 %v249, %v253
      %v257 = vmul.f32 %v250, %v254
      %v258 = vmul.f32 %v251, %v255
      %v259 = vadd.f32 %v245, %v256
      %v260 = vadd.f32 %v246, %v257
      %v261 = vadd.f32 %v247, %v258
      %s262 = scalar_lea.vmem %s219, 72
      %v263 = vld [vmem:[%s262] sm:$0xff]
      %v264 = vld [vmem:[%s262 + $0x8] sm:$0xff]
      %v265 = vld [vmem:[%s262 + $0x10] sm:$0xff]
      %s266 = scalar_lea.vmem %s1, 72
      %v267 = vld [vmem:[%s266] sm:$0xff]
      %v268 = vld [vmem:[%s266 + $0x8] sm:$0xff]
      %v269 = vld [vmem:[%s266 + $0x10] sm:$0xff]
      %v270 = vmul.f32 %v263, %v267
      %v271 = vmul.f32 %v264, %v268
      %v272 = vmul.f32 %v265, %v269
      %v273 = vadd.f32 %v259, %v270
      %v274 = vadd.f32 %v260, %v271
      %v275 = vadd.f32 %v261, %v272
      %v276 = vld [vmem:[%s2] sm:$0xff]
      %v277 = vld [vmem:[%s2 + $0x8] sm:$0xff]
      %v278 = vld [vmem:[%s2 + $0x10] sm:$0xff]
      %v279 = vadd.f32 %v273, %v276
      %v280 = vadd.f32 %v274, %v277
      %v281 = vadd.f32 %v275, %v278
      %v282 = vld [vmem:[%s3] sm:$0xf]
      %v283 = vmul.f32 %v279, %v282
      %284 = vxpose.xlu0.b32.start [1/16] %v283, 128
      %285 = vxpose.xlu0.b32.cont [2/16] 0.0, 128
      %286 = vxpose.xlu0.b32.cont [3/16] 0.0, 128
      %287 = vxpose.xlu0.b32.cont [4/16] 0.0, 128
      %288 = vxpose.xlu0.b32.cont [5/16] 0.0, 128
      %289 = vxpose.xlu0.b32.cont [6/16] 0.0, 128
      %290 = vxpose.xlu0.b32.cont [7/16] 0.0, 128
      %291 = vxpose.xlu0.b32.cont [8/16] 0.0, 128
      %292 = vxpose.xlu0.b32.cont [9/16] 0.0, 128
      %293 = vxpose.xlu0.b32.cont [10/16] 0.0, 128
      %294 = vxpose.xlu0.b32.cont [11/16] 0.0, 128
      %295 = vxpose.xlu0.b32.cont [12/16] 0.0, 128
      %296 = vxpose.xlu0.b32.cont [13/16] 0.0, 128
      %297 = vxpose.xlu0.b32.cont [14/16] 0.0, 128
      %298 = vxpose.xlu0.b32.cont [15/16] 0.0, 128
      %299 = vxpose.xlu0.b32.end [16/16] 0.0, 128
      %v300 = vpop.trf.xlu0
      %v301 = vpop.trf.xlu0
      %v302 = vpop.trf.xlu0
      %v303 = vpop.trf.xlu0
      %v304 = vpop.trf.xlu0
      %v305 = vpop.trf.xlu0
      %v306 = vpop.trf.xlu0
      %v307 = vpop.trf.xlu0
      %v308 = vpop.trf.xlu0
      %v309 = vpop.trf.xlu0
      %v310 = vpop.trf.xlu0
      %v311 = vpop.trf.xlu0
      %v312 = vpop.trf.xlu0
      %v313 = vpop.trf.xlu0
      %v314 = vpop.trf.xlu0
      %v315 = vpop.trf.xlu0
      %vm316 = vcmask 31744
      %v318 = vsel %vm316, %v300, 0
      %v321 = vsel %vm316, %v301, 0
      %v324 = vsel %vm316, %v302, 0
      %v327 = vsel %vm316, %v303, 0
      %v330 = vsel %vm316, %v304, 0
      %v333 = vsel %vm316, %v305, 0
      %v336 = vsel %vm316, %v306, 0
      %v339 = vsel %vm316, %v307, 0
      %v342 = vsel %vm316, %v308, 0
      %v345 = vsel %vm316, %v309, 0
      %vm347 = vcmask 1043456
      %v349 = vsel %vm347, %v280, 0
      %351 = vmatpush.msra.mxu0 0.0
      %352 = vmatpush.msra.mxu0 0.0
      %353 = vmatpush.msra.mxu0 0.0
      %354 = vmatpush.msra.mxu0 0.0
      %355 = vmatpush.msra.mxu0 0.0
      %356 = vmatpush.msra.mxu0 0.0
      %357 = vmatpush.msra.mxu0 0.0
      %358 = vmatpush.msra.mxu0 0.0
      %359 = vmatpush.msra.mxu0 0.0
      %360 = vmatpush.msra.mxu0 0.0
      %361 = vmatpush.msra.mxu0 0.0
      %362 = vmatpush.msra.mxu0 0.0
      %363 = vmatpush.msra.mxu0 0.0
      %364 = vmatpush.msra.mxu0 0.0
      %365 = vmatpush.msra.mxu0 0.0
      %366 = vmatpush.msra.mxu0 %v349
      %367 = vmatmul.f32.gmra.mxu0 %v318
      %v368 = vpop.f32.mrf.mxu0
      %v369 = vadd.f32 0.0, %v368
      %370 = vmatmul.f32.gmra.mxu0 %v321
      %v371 = vpop.f32.mrf.mxu0
      %v372 = vadd.f32 0.0, %v371
      %373 = vmatmul.f32.gmra.mxu0 %v324
      %v374 = vpop.f32.mrf.mxu0
      %v375 = vadd.f32 0.0, %v374
      %376 = vmatmul.f32.gmra.mxu0 %v327
      %v377 = vpop.f32.mrf.mxu0
      %v378 = vadd.f32 0.0, %v377
      %379 = vmatmul.f32.gmra.mxu0 %v330
      %v380 = vpop.f32.mrf.mxu0
      %v381 = vadd.f32 0.0, %v380
      %382 = vmatmul.f32.gmra.mxu0 %v333
      %v383 = vpop.f32.mrf.mxu0
      %v384 = vadd.f32 0.0, %v383
      %385 = vmatmul.f32.gmra.mxu0 %v336
      %v386 = vpop.f32.mrf.mxu0
      %v387 = vadd.f32 0.0, %v386
      %388 = vmatmul.f32.gmra.mxu0 %v339
      %v389 = vpop.f32.mrf.mxu0
      %v390 = vadd.f32 0.0, %v389
      %391 = vmatmul.f32.gmra.mxu0 %v342
      %v392 = vpop.f32.mrf.mxu0
      %v393 = vadd.f32 0.0, %v392
      %394 = vmatmul.f32.gmra.mxu0 %v345
      %v395 = vpop.f32.mrf.mxu0
      %v396 = vadd.f32 0.0, %v395
      %397 = vdwg.mxu0
      %vm398 = vcmask 613376
      %v399 = vsel %vm398, %v369, -inf
      %400 = vmax.xlane.f32.xlu0 %v399
      %v401 = vpop.xlane.xlu0 %400
      %v402 = vsel %vm398, %v372, -inf
      %403 = vmax.xlane.f32.xlu0 %v402
      %v404 = vpop.xlane.xlu0 %403
      %v405 = vsel %vm398, %v375, -inf
      %406 = vmax.xlane.f32.xlu0 %v405
      %v407 = vpop.xlane.xlu0 %406
      %v408 = vsel %vm398, %v378, -inf
      %409 = vmax.xlane.f32.xlu0 %v408
      %v410 = vpop.xlane.xlu0 %409
      %v411 = vsel %vm398, %v381, -inf
      %412 = vmax.xlane.f32.xlu0 %v411
      %v413 = vpop.xlane.xlu0 %412
      %v414 = vsel %vm398, %v384, -inf
      %415 = vmax.xlane.f32.xlu0 %v414
      %v416 = vpop.xlane.xlu0 %415
      %v417 = vsel %vm398, %v387, -inf
      %418 = vmax.xlane.f32.xlu0 %v417
      %v419 = vpop.xlane.xlu0 %418
      %v420 = vsel %vm398, %v390, -inf
      %421 = vmax.xlane.f32.xlu0 %v420
      %v422 = vpop.xlane.xlu0 %421
      %v423 = vsel %vm398, %v393, -inf
      %424 = vmax.xlane.f32.xlu0 %v423
      %v425 = vpop.xlane.xlu0 %424
      %vm426 = vcmask 608256
      %v427 = vsel %vm426, %v396, -inf
      %428 = vmax.xlane.f32.xlu0 %v427
      %v429 = vpop.xlane.xlu0 %428
      %v430 = vsub.f32 %v369, %v401
      %v431 = vsub.f32 %v372, %v404
      %v432 = vsub.f32 %v375, %v407
      %v433 = vsub.f32 %v378, %v410
      %v434 = vsub.f32 %v381, %v413
      %v435 = vsub.f32 %v384, %v416
      %v436 = vsub.f32 %v387, %v419
      %v437 = vsub.f32 %v390, %v422
      %v438 = vsub.f32 %v393, %v425
      %v439 = vsub.f32 %v396, %v429
      %v440 = vmul.f32 %v430, 1.442695
      %v441 = vpow.pop %v440
      %v442 = vmul.f32 %v431, 1.442695
      %v443 = vpow.pop %v442
      %v444 = vmul.f32 %v432, 1.442695
      %v445 = vpow.pop %v444
      %v446 = vmul.f32 %v433, 1.442695
      %v447 = vpow.pop %v446
      %v448 = vmul.f32 %v434, 1.442695
      %v449 = vpow.pop %v448
      %v450 = vmul.f32 %v435, 1.442695
      %v451 = vpow.pop %v450
      %v452 = vmul.f32 %v436, 1.442695
      %v453 = vpow.pop %v452
      %v454 = vmul.f32 %v437, 1.442695
      %v455 = vpow.pop %v454
      %v456 = vmul.f32 %v438, 1.442695
      %v457 = vpow.pop %v456
      %v458 = vmul.f32 %v439, 1.442695
      %v459 = vpow.pop %v458
      %v460 = vsel %vm398, %v441, 0.0
      %461 = vadd.xlane.f32.xlu0 %v460
      %v462 = vpop.xlane.xlu0 %461
      %v463 = vsel %vm398, %v443, 0.0
      %464 = vadd.xlane.f32.xlu0 %v463
      %v465 = vpop.xlane.xlu0 %464
      %v466 = vsel %vm398, %v445, 0.0
      %467 = vadd.xlane.f32.xlu0 %v466
      %v468 = vpop.xlane.xlu0 %467
      %v469 = vsel %vm398, %v447, 0.0
      %470 = vadd.xlane.f32.xlu0 %v469
      %v471 = vpop.xlane.xlu0 %470
      %v472 = vsel %vm398, %v449, 0.0
      %473 = vadd.xlane.f32.xlu0 %v472
      %v474 = vpop.xlane.xlu0 %473
      %v475 = vsel %vm398, %v451, 0.0
      %476 = vadd.xlane.f32.xlu0 %v475
      %v477 = vpop.xlane.xlu0 %476
      %v478 = vsel %vm398, %v453, 0.0
      %479 = vadd.xlane.f32.xlu0 %v478
      %v480 = vpop.xlane.xlu0 %479
      %v481 = vsel %vm398, %v455, 0.0
      %482 = vadd.xlane.f32.xlu0 %v481
      %v483 = vpop.xlane.xlu0 %482
      %v484 = vsel %vm398, %v457, 0.0
      %485 = vadd.xlane.f32.xlu0 %v484
      %v486 = vpop.xlane.xlu0 %485
      %v487 = vsel %vm426, %v459, 0.0
      %488 = vadd.xlane.f32.xlu0 %v487
      %v489 = vpop.xlane.xlu0 %488
      %v490 = vrcp.pop %v462
      %v491 = vmul.f32 %v462, %v490
      %v492 = vsub.f32 1.0, %v491
      %v493 = vmul.f32 %v490, %v492
      %v494 = vadd.f32 %v490, %v493
      %vm495 = vweird.f32 %v462
      %vm496 = vweird.f32 %v490
      %vm497 = vmor %vm495, %vm496
      %v498 = vsel %vm497, %v490, %v494
      %v499 = vand.u32 2147483647, %v462
      %vm500 = vcmp.eq.f32.partialorder %v499, 8.507059e+37
      %v501 = vand.u32 %v462, 2147483648
      %v502 = vor.u32 1.1754944e-38, %v501
      %v503 = vsel %vm500, %v502, %v498
      %v504 = vrcp.pop %v465
      %v505 = vmul.f32 %v465, %v504
      %v506 = vsub.f32 1.0, %v505
      %v507 = vmul.f32 %v504, %v506
      %v508 = vadd.f32 %v504, %v507
      %vm509 = vweird.f32 %v465
      %vm510 = vweird.f32 %v504
      %vm511 = vmor %vm509, %vm510
      %v512 = vsel %vm511, %v504, %v508
      %v513 = vand.u32 2147483647, %v465
      %vm514 = vcmp.eq.f32.partialorder %v513, 8.507059e+37
      %v515 = vand.u32 %v465, 2147483648
      %v516 = vor.u32 1.1754944e-38, %v515
      %v517 = vsel %vm514, %v516, %v512
      %v518 = vrcp.pop %v468
      %v519 = vmul.f32 %v468, %v518
      %v520 = vsub.f32 1.0, %v519
      %v521 = vmul.f32 %v518, %v520
      %v522 = vadd.f32 %v518, %v521
      %vm523 = vweird.f32 %v468
      %vm524 = vweird.f32 %v518
      %vm525 = vmor %vm523, %vm524
      %v526 = vsel %vm525, %v518, %v522
      %v527 = vand.u32 2147483647, %v468
      %vm528 = vcmp.eq.f32.partialorder %v527, 8.507059e+37
      %v529 = vand.u32 %v468, 2147483648
      %v530 = vor.u32 1.1754944e-38, %v529
      %v531 = vsel %vm528, %v530, %v526
      %v532 = vrcp.pop %v471
      %v533 = vmul.f32 %v471, %v532
      %v534 = vsub.f32 1.0, %v533
      %v535 = vmul.f32 %v532, %v534
      %v536 = vadd.f32 %v532, %v535
      %vm537 = vweird.f32 %v471
      %vm538 = vweird.f32 %v532
      %vm539 = vmor %vm537, %vm538
      %v540 = vsel %vm539, %v532, %v536
      %v541 = vand.u32 2147483647, %v471
      %vm542 = vcmp.eq.f32.partialorder %v541, 8.507059e+37
      %v543 = vand.u32 %v471, 2147483648
      %v544 = vor.u32 1.1754944e-38, %v543
      %v545 = vsel %vm542, %v544, %v540
      %v546 = vrcp.pop %v474
      %v547 = vmul.f32 %v474, %v546
      %v548 = vsub.f32 1.0, %v547
      %v549 = vmul.f32 %v546, %v548
      %v550 = vadd.f32 %v546, %v549
      %vm551 = vweird.f32 %v474
      %vm552 = vweird.f32 %v546
      %vm553 = vmor %vm551, %vm552
      %v554 = vsel %vm553, %v546, %v550
      %v555 = vand.u32 2147483647, %v474
      %vm556 = vcmp.eq.f32.partialorder %v555, 8.507059e+37
      %v557 = vand.u32 %v474, 2147483648
      %v558 = vor.u32 1.1754944e-38, %v557
      %v559 = vsel %vm556, %v558, %v554
      %v560 = vrcp.pop %v477
      %v561 = vmul.f32 %v477, %v560
      %v562 = vsub.f32 1.0, %v561
      %v563 = vmul.f32 %v560, %v562
      %v564 = vadd.f32 %v560, %v563
      %vm565 = vweird.f32 %v477
      %vm566 = vweird.f32 %v560
      %vm567 = vmor %vm565, %vm566
      %v568 = vsel %vm567, %v560, %v564
      %v569 = vand.u32 2147483647, %v477
      %vm570 = vcmp.eq.f32.partialorder %v569, 8.507059e+37
      %v571 = vand.u32 %v477, 2147483648
      %v572 = vor.u32 1.1754944e-38, %v571
      %v573 = vsel %vm570, %v572, %v568
      %v574 = vrcp.pop %v480
      %v575 = vmul.f32 %v480, %v574
      %v576 = vsub.f32 1.0, %v575
      %v577 = vmul.f32 %v574, %v576
      %v578 = vadd.f32 %v574, %v577
      %vm579 = vweird.f32 %v480
      %vm580 = vweird.f32 %v574
      %vm581 = vmor %vm579, %vm580
      %v582 = vsel %vm581, %v574, %v578
      %v583 = vand.u32 2147483647, %v480
      %vm584 = vcmp.eq.f32.partialorder %v583, 8.507059e+37
      %v585 = vand.u32 %v480, 2147483648
      %v586 = vor.u32 1.1754944e-38, %v585
      %v587 = vsel %vm584, %v586, %v582
      %v588 = vrcp.pop %v483
      %v589 = vmul.f32 %v483, %v588
      %v590 = vsub.f32 1.0, %v589
      %v591 = vmul.f32 %v588, %v590
      %v592 = vadd.f32 %v588, %v591
      %vm593 = vweird.f32 %v483
      %vm594 = vweird.f32 %v588
      %vm595 = vmor %vm593, %vm594
      %v596 = vsel %vm595, %v588, %v592
      %v597 = vand.u32 2147483647, %v483
      %vm598 = vcmp.eq.f32.partialorder %v597, 8.507059e+37
      %v599 = vand.u32 %v483, 2147483648
      %v600 = vor.u32 1.1754944e-38, %v599
      %v601 = vsel %vm598, %v600, %v596
      %v602 = vrcp.pop %v486
      %v603 = vmul.f32 %v486, %v602
      %v604 = vsub.f32 1.0, %v603
      %v605 = vmul.f32 %v602, %v604
      %v606 = vadd.f32 %v602, %v605
      %vm607 = vweird.f32 %v486
      %vm608 = vweird.f32 %v602
      %vm609 = vmor %vm607, %vm608
      %v610 = vsel %vm609, %v602, %v606
      %v611 = vand.u32 2147483647, %v486
      %vm612 = vcmp.eq.f32.partialorder %v611, 8.507059e+37
      %v613 = vand.u32 %v486, 2147483648
      %v614 = vor.u32 1.1754944e-38, %v613
      %v615 = vsel %vm612, %v614, %v610
      %v616 = vrcp.pop %v489
      %v617 = vmul.f32 %v489, %v616
      %v618 = vsub.f32 1.0, %v617
      %v619 = vmul.f32 %v616, %v618
      %v620 = vadd.f32 %v616, %v619
      %vm621 = vweird.f32 %v489
      %vm622 = vweird.f32 %v616
      %vm623 = vmor %vm621, %vm622
      %v624 = vsel %vm623, %v616, %v620
      %v625 = vand.u32 2147483647, %v489
      %vm626 = vcmp.eq.f32.partialorder %v625, 8.507059e+37
      %v627 = vand.u32 %v489, 2147483648
      %v628 = vor.u32 1.1754944e-38, %v627
      %v629 = vsel %vm626, %v628, %v624
      %v630 = vmul.f32 %v441, %v503
      %v631 = vmul.f32 %v443, %v517
      %v632 = vmul.f32 %v445, %v531
      %v633 = vmul.f32 %v447, %v545
      %v634 = vmul.f32 %v449, %v559
      %v635 = vmul.f32 %v451, %v573
      %v636 = vmul.f32 %v453, %v587
      %v637 = vmul.f32 %v455, %v601
      %v638 = vmul.f32 %v457, %v615
      %v639 = vmul.f32 %v459, %v629
      %v641 = vsel %vm398, %v630, 0
      %v644 = vsel %vm398, %v631, 0
      %v647 = vsel %vm398, %v632, 0
      %v650 = vsel %vm398, %v633, 0
      %v653 = vsel %vm398, %v634, 0
      %v656 = vsel %vm398, %v635, 0
      %v659 = vsel %vm398, %v636, 0
      %v662 = vsel %vm398, %v637, 0
      %v665 = vsel %vm398, %v638, 0
      %v668 = vsel %vm398, %v639, 0
      %v671 = vsel %vm398, %v281, 0
      %673 = vmatpush.xpose.msra.mxu0 0.0
      %674 = vmatpush.xpose.msra.mxu0 0.0
      %675 = vmatpush.xpose.msra.mxu0 0.0
      %676 = vmatpush.xpose.msra.mxu0 0.0
      %677 = vmatpush.xpose.msra.mxu0 0.0
      %678 = vmatpush.xpose.msra.mxu0 0.0
      %679 = vmatpush.xpose.msra.mxu0 0.0
      %680 = vmatpush.xpose.msra.mxu0 0.0
      %681 = vmatpush.xpose.msra.mxu0 0.0
      %682 = vmatpush.xpose.msra.mxu0 0.0
      %683 = vmatpush.xpose.msra.mxu0 0.0
      %684 = vmatpush.xpose.msra.mxu0 0.0
      %685 = vmatpush.xpose.msra.mxu0 0.0
      %686 = vmatpush.xpose.msra.mxu0 0.0
      %687 = vmatpush.xpose.msra.mxu0 0.0
      %688 = vmatpush.xpose.msra.mxu0 %v671
      %689 = vmatmul.f32.gmra.mxu0 %v641
      %v690 = vpop.f32.mrf.mxu0
      %v691 = vadd.f32 0.0, %v690
      %692 = vmatmul.f32.gmra.mxu0 %v644
      %v693 = vpop.f32.mrf.mxu0
      %v694 = vadd.f32 0.0, %v693
      %695 = vmatmul.f32.gmra.mxu0 %v647
      %v696 = vpop.f32.mrf.mxu0
      %v697 = vadd.f32 0.0, %v696
      %698 = vmatmul.f32.gmra.mxu0 %v650
      %v699 = vpop.f32.mrf.mxu0
      %v700 = vadd.f32 0.0, %v699
      %701 = vmatmul.f32.gmra.mxu0 %v653
      %v702 = vpop.f32.mrf.mxu0
      %v703 = vadd.f32 0.0, %v702
      %704 = vmatmul.f32.gmra.mxu0 %v656
      %v705 = vpop.f32.mrf.mxu0
      %v706 = vadd.f32 0.0, %v705
      %707 = vmatmul.f32.gmra.mxu0 %v659
      %v708 = vpop.f32.mrf.mxu0
      %v709 = vadd.f32 0.0, %v708
      %710 = vmatmul.f32.gmra.mxu0 %v662
      %v711 = vpop.f32.mrf.mxu0
      %v712 = vadd.f32 0.0, %v711
      %713 = vmatmul.f32.gmra.mxu0 %v665
      %v714 = vpop.f32.mrf.mxu0
      %v715 = vadd.f32 0.0, %v714
      %716 = vmatmul.f32.gmra.mxu0 %v668
      %v717 = vpop.f32.mrf.mxu0
      %v718 = vadd.f32 0.0, %v717
      %719 = vdwg.mxu0
      %v720 = vld [vmem:[%s4] sm:$0xff]
      %v721 = vld [vmem:[%s4 + $0x8] sm:$0xff]
      %v722 = vld [vmem:[%s4 + $0x10] sm:$0xff]
      %v723 = vld [vmem:[%s4 + $0x18] sm:$0xff]
      %v724 = vld [vmem:[%s4 + $0x20] sm:$0xff]
      %v725 = vld [vmem:[%s4 + $0x28] sm:$0xff]
      %v726 = vld [vmem:[%s4 + $0x30] sm:$0xff]
      %v727 = vld [vmem:[%s4 + $0x38] sm:$0xff]
      %v728 = vld [vmem:[%s4 + $0x40] sm:$0xff]
      %v729 = vld [vmem:[%s4 + $0x48] sm:$0x7]
      %v730 = vmul.f32 %v691, %v720
      %v731 = vmul.f32 %v694, %v721
      %v732 = vmul.f32 %v697, %v722
      %v733 = vmul.f32 %v700, %v723
      %v734 = vmul.f32 %v703, %v724
      %v735 = vmul.f32 %v706, %v725
      %v736 = vmul.f32 %v709, %v726
      %v737 = vmul.f32 %v712, %v727
      %v738 = vmul.f32 %v715, %v728
      %v739 = vmul.f32 %v718, %v729
      %740 = vst.msk [vmem:[%s224] sm:$0xff] %vm316, %v730
      %741 = vst.msk [vmem:[%s224 + $0x8] sm:$0xff] %vm316, %v731
      %742 = vst.msk [vmem:[%s224 + $0x10] sm:$0xff] %vm316, %v732
      %743 = vst.msk [vmem:[%s224 + $0x18] sm:$0xff] %vm316, %v733
      %744 = vst.msk [vmem:[%s224 + $0x20] sm:$0xff] %vm316, %v734
      %745 = vst.msk [vmem:[%s224 + $0x28] sm:$0xff] %vm316, %v735
      %746 = vst.msk [vmem:[%s224 + $0x30] sm:$0xff] %vm316, %v736
      %747 = vst.msk [vmem:[%s224 + $0x38] sm:$0xff] %vm316, %v737
      %748 = vst.msk [vmem:[%s224 + $0x40] sm:$0xff] %vm316, %v738
      %vm749 = vcmask 26624
      %750 = vst.msk [vmem:[%s224 + $0x48] sm:$0x7] %vm749, %v739
      %s751 = scalar_lea.vmem %s3, 4
      %v752 = vld [vmem:[%s751] sm:$0xf]
      %v754 = vrot.slane %v752, 4
      %v756 = vmul.f32 %v279, %v754
      %v758 = vrot.slane %v756, 4
      %760 = vxpose.xlu0.b32.start [1/16] %v758, 128
      %761 = vxpose.xlu0.b32.cont [2/16] 0.0, 128
      %762 = vxpose.xlu0.b32.cont [3/16] 0.0, 128
      %763 = vxpose.xlu0.b32.cont [4/16] 0.0, 128
      %764 = vxpose.xlu0.b32.cont [5/16] 0.0, 128
      %765 = vxpose.xlu0.b32.cont [6/16] 0.0, 128
      %766 = vxpose.xlu0.b32.cont [7/16] 0.0, 128
      %767 = vxpose.xlu0.b32.cont [8/16] 0.0, 128
      %768 = vxpose.xlu0.b32.cont [9/16] 0.0, 128
      %769 = vxpose.xlu0.b32.cont [10/16] 0.0, 128
      %770 = vxpose.xlu0.b32.cont [11/16] 0.0, 128
      %771 = vxpose.xlu0.b32.cont [12/16] 0.0, 128
      %772 = vxpose.xlu0.b32.cont [13/16] 0.0, 128
      %773 = vxpose.xlu0.b32.cont [14/16] 0.0, 128
      %774 = vxpose.xlu0.b32.cont [15/16] 0.0, 128
      %775 = vxpose.xlu0.b32.end [16/16] 0.0, 128
      %v776 = vpop.trf.xlu0
      %v777 = vpop.trf.xlu0
      %v778 = vpop.trf.xlu0
      %v779 = vpop.trf.xlu0
      %v780 = vpop.trf.xlu0
      %v781 = vpop.trf.xlu0
      %v782 = vpop.trf.xlu0
      %v783 = vpop.trf.xlu0
      %v784 = vpop.trf.xlu0
      %v785 = vpop.trf.xlu0
      %v786 = vpop.trf.xlu0
      %v787 = vpop.trf.xlu0
      %v788 = vpop.trf.xlu0
      %v789 = vpop.trf.xlu0
      %v790 = vpop.trf.xlu0
      %v791 = vpop.trf.xlu0
      %v792 = vrot.slane %v280, 4
      %v794 = vsel %vm316, %v776, 0
      %v797 = vsel %vm316, %v777, 0
      %v800 = vsel %vm316, %v778, 0
      %v803 = vsel %vm316, %v779, 0
      %v806 = vsel %vm316, %v780, 0
      %v809 = vsel %vm316, %v781, 0
      %v812 = vsel %vm316, %v782, 0
      %v815 = vsel %vm316, %v783, 0
      %v818 = vsel %vm316, %v784, 0
      %v821 = vsel %vm316, %v785, 0
      %v823 = vsel %vm347, %v792, 0
      %825 = vmatpush.msra.mxu0 0.0
      %826 = vmatpush.msra.mxu0 0.0
      %827 = vmatpush.msra.mxu0 0.0
      %828 = vmatpush.msra.mxu0 0.0
      %829 = vmatpush.msra.mxu0 0.0
      %830 = vmatpush.msra.mxu0 0.0
      %831 = vmatpush.msra.mxu0 0.0
      %832 = vmatpush.msra.mxu0 0.0
      %833 = vmatpush.msra.mxu0 0.0
      %834 = vmatpush.msra.mxu0 0.0
      %835 = vmatpush.msra.mxu0 0.0
      %836 = vmatpush.msra.mxu0 0.0
      %837 = vmatpush.msra.mxu0 0.0
      %838 = vmatpush.msra.mxu0 0.0
      %839 = vmatpush.msra.mxu0 0.0
      %840 = vmatpush.msra.mxu0 %v823
      %841 = vmatmul.f32.gmra.mxu0 %v794
      %v842 = vpop.f32.mrf.mxu0
      %v843 = vadd.f32 0.0, %v842
      %844 = vmatmul.f32.gmra.mxu0 %v797
      %v845 = vpop.f32.mrf.mxu0
      %v846 = vadd.f32 0.0, %v845
      %847 = vmatmul.f32.gmra.mxu0 %v800
      %v848 = vpop.f32.mrf.mxu0
      %v849 = vadd.f32 0.0, %v848
      %850 = vmatmul.f32.gmra.mxu0 %v803
      %v851 = vpop.f32.mrf.mxu0
      %v852 = vadd.f32 0.0, %v851
      %853 = vmatmul.f32.gmra.mxu0 %v806
      %v854 = vpop.f32.mrf.mxu0
      %v855 = vadd.f32 0.0, %v854
      %856 = vmatmul.f32.gmra.mxu0 %v809
      %v857 = vpop.f32.mrf.mxu0
      %v858 = vadd.f32 0.0, %v857
      %859 = vmatmul.f32.gmra.mxu0 %v812
      %v860 = vpop.f32.mrf.mxu0
      %v861 = vadd.f32 0.0, %v860
      %862 = vmatmul.f32.gmra.mxu0 %v815
      %v863 = vpop.f32.mrf.mxu0
      %v864 = vadd.f32 0.0, %v863
      %865 = vmatmul.f32.gmra.mxu0 %v818
      %v866 = vpop.f32.mrf.mxu0
      %v867 = vadd.f32 0.0, %v866
      %868 = vmatmul.f32.gmra.mxu0 %v821
      %v869 = vpop.f32.mrf.mxu0
      %v870 = vadd.f32 0.0, %v869
      %871 = vdwg.mxu0
      %v872 = vsel %vm398, %v843, -inf
      %873 = vmax.xlane.f32.xlu0 %v872
      %v874 = vpop.xlane.xlu0 %873
      %v875 = vsel %vm398, %v846, -inf
      %876 = vmax.xlane.f32.xlu0 %v875
      %v877 = vpop.xlane.xlu0 %876
      %v878 = vsel %vm398, %v849, -inf
      %879 = vmax.xlane.f32.xlu0 %v878
      %v880 = vpop.xlane.xlu0 %879
      %v881 = vsel %vm398, %v852, -inf
      %882 = vmax.xlane.f32.xlu0 %v881
      %v883 = vpop.xlane.xlu0 %882
      %v884 = vsel %vm398, %v855, -inf
      %885 = vmax.xlane.f32.xlu0 %v884
      %v886 = vpop.xlane.xlu0 %885
      %v887 = vsel %vm398, %v858, -inf
      %888 = vmax.xlane.f32.xlu0 %v887
      %v889 = vpop.xlane.xlu0 %888
      %v890 = vsel %vm398, %v861, -inf
      %891 = vmax.xlane.f32.xlu0 %v890
      %v892 = vpop.xlane.xlu0 %891
      %v893 = vsel %vm398, %v864, -inf
      %894 = vmax.xlane.f32.xlu0 %v893
      %v895 = vpop.xlane.xlu0 %894
      %v896 = vsel %vm398, %v867, -inf
      %897 = vmax.xlane.f32.xlu0 %v896
      %v898 = vpop.xlane.xlu0 %897
      %v899 = vsel %vm426, %v870, -inf
      %900 = vmax.xlane.f32.xlu0 %v899
      %v901 = vpop.xlane.xlu0 %900
      %v902 = vsub.f32 %v843, %v874
      %v903 = vsub.f32 %v846, %v877
      %v904 = vsub.f32 %v849, %v880
      %v905 = vsub.f32 %v852, %v883
      %v906 = vsub.f32 %v855, %v886
      %v907 = vsub.f32 %v858, %v889
      %v908 = vsub.f32 %v861, %v892
      %v909 = vsub.f32 %v864, %v895
      %v910 = vsub.f32 %v867, %v898
      %v911 = vsub.f32 %v870, %v901
      %v912 = vmul.f32 %v902, 1.442695
      %v913 = vpow.pop %v912
      %v914 = vmul.f32 %v903, 1.442695
      %v915 = vpow.pop %v914
      %v916 = vmul.f32 %v904, 1.442695
      %v917 = vpow.pop %v916
      %v918 = vmul.f32 %v905, 1.442695
      %v919 = vpow.pop %v918
      %v920 = vmul.f32 %v906, 1.442695
      %v921 = vpow.pop %v920
      %v922 = vmul.f32 %v907, 1.442695
      %v923 = vpow.pop %v922
      %v924 = vmul.f32 %v908, 1.442695
      %v925 = vpow.pop %v924
      %v926 = vmul.f32 %v909, 1.442695
      %v927 = vpow.pop %v926
      %v928 = vmul.f32 %v910, 1.442695
      %v929 = vpow.pop %v928
      %v930 = vmul.f32 %v911, 1.442695
      %v931 = vpow.pop %v930
      %v932 = vsel %vm398, %v913, 0.0
      %933 = vadd.xlane.f32.xlu0 %v932
      %v934 = vpop.xlane.xlu0 %933
      %v935 = vsel %vm398, %v915, 0.0
      %936 = vadd.xlane.f32.xlu0 %v935
      %v937 = vpop.xlane.xlu0 %936
      %v938 = vsel %vm398, %v917, 0.0
      %939 = vadd.xlane.f32.xlu0 %v938
      %v940 = vpop.xlane.xlu0 %939
      %v941 = vsel %vm398, %v919, 0.0
      %942 = vadd.xlane.f32.xlu0 %v941
      %v943 = vpop.xlane.xlu0 %942
      %v944 = vsel %vm398, %v921, 0.0
      %945 = vadd.xlane.f32.xlu0 %v944
      %v946 = vpop.xlane.xlu0 %945
      %v947 = vsel %vm398, %v923, 0.0
      %948 = vadd.xlane.f32.xlu0 %v947
      %v949 = vpop.xlane.xlu0 %948
      %v950 = vsel %vm398, %v925, 0.0
      %951 = vadd.xlane.f32.xlu0 %v950
      %v952 = vpop.xlane.xlu0 %951
      %v953 = vsel %vm398, %v927, 0.0
      %954 = vadd.xlane.f32.xlu0 %v953
      %v955 = vpop.xlane.xlu0 %954
      %v956 = vsel %vm398, %v929, 0.0
      %957 = vadd.xlane.f32.xlu0 %v956
      %v958 = vpop.xlane.xlu0 %957
      %v959 = vsel %vm426, %v931, 0.0
      %960 = vadd.xlane.f32.xlu0 %v959
      %v961 = vpop.xlane.xlu0 %960
      %v962 = vrcp.pop %v934
      %v963 = vmul.f32 %v934, %v962
      %v964 = vsub.f32 1.0, %v963
      %v965 = vmul.f32 %v962, %v964
      %v966 = vadd.f32 %v962, %v965
      %vm967 = vweird.f32 %v934
      %vm968 = vweird.f32 %v962
      %vm969 = vmor %vm967, %vm968
      %v970 = vsel %vm969, %v962, %v966
      %v971 = vand.u32 2147483647, %v934
      %vm972 = vcmp.eq.f32.partialorder %v971, 8.507059e+37
      %v973 = vand.u32 %v934, 2147483648
      %v974 = vor.u32 1.1754944e-38, %v973
      %v975 = vsel %vm972, %v974, %v970
      %v976 = vrcp.pop %v937
      %v977 = vmul.f32 %v937, %v976
      %v978 = vsub.f32 1.0, %v977
      %v979 = vmul.f32 %v976, %v978
      %v980 = vadd.f32 %v976, %v979
      %vm981 = vweird.f32 %v937
      %vm982 = vweird.f32 %v976
      %vm983 = vmor %vm981, %vm982
      %v984 = vsel %vm983, %v976, %v980
      %v985 = vand.u32 2147483647, %v937
      %vm986 = vcmp.eq.f32.partialorder %v985, 8.507059e+37
      %v987 = vand.u32 %v937, 2147483648
      %v988 = vor.u32 1.1754944e-38, %v987
      %v989 = vsel %vm986, %v988, %v984
      %v990 = vrcp.pop %v940
      %v991 = vmul.f32 %v940, %v990
      %v992 = vsub.f32 1.0, %v991
      %v993 = vmul.f32 %v990, %v992
      %v994 = vadd.f32 %v990, %v993
      %vm995 = vweird.f32 %v940
      %vm996 = vweird.f32 %v990
      %vm997 = vmor %vm995, %vm996
      %v998 = vsel %vm997, %v990, %v994
      %v999 = vand.u32 2147483647, %v940
      %vm1000 = vcmp.eq.f32.partialorder %v999, 8.507059e+37
      %v1001 = vand.u32 %v940, 2147483648
      %v1002 = vor.u32 1.1754944e-38, %v1001
      %v1003 = vsel %vm1000, %v1002, %v998
      %v1004 = vrcp.pop %v943
      %v1005 = vmul.f32 %v943, %v1004
      %v1006 = vsub.f32 1.0, %v1005
      %v1007 = vmul.f32 %v1004, %v1006
      %v1008 = vadd.f32 %v1004, %v1007
      %vm1009 = vweird.f32 %v943
      %vm1010 = vweird.f32 %v1004
      %vm1011 = vmor %vm1009, %vm1010
      %v1012 = vsel %vm1011, %v1004, %v1008
      %v1013 = vand.u32 2147483647, %v943
      %vm1014 = vcmp.eq.f32.partialorder %v1013, 8.507059e+37
      %v1015 = vand.u32 %v943, 2147483648
      %v1016 = vor.u32 1.1754944e-38, %v1015
      %v1017 = vsel %vm1014, %v1016, %v1012
      %v1018 = vrcp.pop %v946
      %v1019 = vmul.f32 %v946, %v1018
      %v1020 = vsub.f32 1.0, %v1019
      %v1021 = vmul.f32 %v1018, %v1020
      %v1022 = vadd.f32 %v1018, %v1021
      %vm1023 = vweird.f32 %v946
      %vm1024 = vweird.f32 %v1018
      %vm1025 = vmor %vm1023, %vm1024
      %v1026 = vsel %vm1025, %v1018, %v1022
      %v1027 = vand.u32 2147483647, %v946
      %vm1028 = vcmp.eq.f32.partialorder %v1027, 8.507059e+37
      %v1029 = vand.u32 %v946, 2147483648
      %v1030 = vor.u32 1.1754944e-38, %v1029
      %v1031 = vsel %vm1028, %v1030, %v1026
      %v1032 = vrcp.pop %v949
      %v1033 = vmul.f32 %v949, %v1032
      %v1034 = vsub.f32 1.0, %v1033
      %v1035 = vmul.f32 %v1032, %v1034
      %v1036 = vadd.f32 %v1032, %v1035
      %vm1037 = vweird.f32 %v949
      %vm1038 = vweird.f32 %v1032
      %vm1039 = vmor %vm1037, %vm1038
      %v1040 = vsel %vm1039, %v1032, %v1036
      %v1041 = vand.u32 2147483647, %v949
      %vm1042 = vcmp.eq.f32.partialorder %v1041, 8.507059e+37
      %v1043 = vand.u32 %v949, 2147483648
      %v1044 = vor.u32 1.1754944e-38, %v1043
      %v1045 = vsel %vm1042, %v1044, %v1040
      %v1046 = vrcp.pop %v952
      %v1047 = vmul.f32 %v952, %v1046
      %v1048 = vsub.f32 1.0, %v1047
      %v1049 = vmul.f32 %v1046, %v1048
      %v1050 = vadd.f32 %v1046, %v1049
      %vm1051 = vweird.f32 %v952
      %vm1052 = vweird.f32 %v1046
      %vm1053 = vmor %vm1051, %vm1052
      %v1054 = vsel %vm1053, %v1046, %v1050
      %v1055 = vand.u32 2147483647, %v952
      %vm1056 = vcmp.eq.f32.partialorder %v1055, 8.507059e+37
      %v1057 = vand.u32 %v952, 2147483648
      %v1058 = vor.u32 1.1754944e-38, %v1057
      %v1059 = vsel %vm1056, %v1058, %v1054
      %v1060 = vrcp.pop %v955
      %v1061 = vmul.f32 %v955, %v1060
      %v1062 = vsub.f32 1.0, %v1061
      %v1063 = vmul.f32 %v1060, %v1062
      %v1064 = vadd.f32 %v1060, %v1063
      %vm1065 = vweird.f32 %v955
      %vm1066 = vweird.f32 %v1060
      %vm1067 = vmor %vm1065, %vm1066
      %v1068 = vsel %vm1067, %v1060, %v1064
      %v1069 = vand.u32 2147483647, %v955
      %vm1070 = vcmp.eq.f32.partialorder %v1069, 8.507059e+37
      %v1071 = vand.u32 %v955, 2147483648
      %v1072 = vor.u32 1.1754944e-38, %v1071
      %v1073 = vsel %vm1070, %v1072, %v1068
      %v1074 = vrcp.pop %v958
      %v1075 = vmul.f32 %v958, %v1074
      %v1076 = vsub.f32 1.0, %v1075
      %v1077 = vmul.f32 %v1074, %v1076
      %v1078 = vadd.f32 %v1074, %v1077
      %vm1079 = vweird.f32 %v958
      %vm1080 = vweird.f32 %v1074
      %vm1081 = vmor %vm1079, %vm1080
      %v1082 = vsel %vm1081, %v1074, %v1078
      %v1083 = vand.u32 2147483647, %v958
      %vm1084 = vcmp.eq.f32.partialorder %v1083, 8.507059e+37
      %v1085 = vand.u32 %v958, 2147483648
      %v1086 = vor.u32 1.1754944e-38, %v1085
      %v1087 = vsel %vm1084, %v1086, %v1082
      %v1088 = vrcp.pop %v961
      %v1089 = vmul.f32 %v961, %v1088
      %v1090 = vsub.f32 1.0, %v1089
      %v1091 = vmul.f32 %v1088, %v1090
      %v1092 = vadd.f32 %v1088, %v1091
      %vm1093 = vweird.f32 %v961
      %vm1094 = vweird.f32 %v1088
      %vm1095 = vmor %vm1093, %vm1094
      %v1096 = vsel %vm1095, %v1088, %v1092
      %v1097 = vand.u32 2147483647, %v961
      %vm1098 = vcmp.eq.f32.partialorder %v1097, 8.507059e+37
      %v1099 = vand.u32 %v961, 2147483648
      %v1100 = vor.u32 1.1754944e-38, %v1099
      %v1101 = vsel %vm1098, %v1100, %v1096
      %v1102 = vmul.f32 %v913, %v975
      %v1103 = vmul.f32 %v915, %v989
      %v1104 = vmul.f32 %v917, %v1003
      %v1105 = vmul.f32 %v919, %v1017
      %v1106 = vmul.f32 %v921, %v1031
      %v1107 = vmul.f32 %v923, %v1045
      %v1108 = vmul.f32 %v925, %v1059
      %v1109 = vmul.f32 %v927, %v1073
      %v1110 = vmul.f32 %v929, %v1087
      %v1111 = vmul.f32 %v931, %v1101
      %v1112 = vrot.slane %v281, 4
      %v1114 = vsel %vm398, %v1102, 0
      %v1117 = vsel %vm398, %v1103, 0
      %v1120 = vsel %vm398, %v1104, 0
      %v1123 = vsel %vm398, %v1105, 0
      %v1126 = vsel %vm398, %v1106, 0
      %v1129 = vsel %vm398, %v1107, 0
      %v1132 = vsel %vm398, %v1108, 0
      %v1135 = vsel %vm398, %v1109, 0
      %v1138 = vsel %vm398, %v1110, 0
      %v1141 = vsel %vm398, %v1111, 0
      %v1143 = vsel %vm398, %v1112, 0
      %1145 = vmatpush.xpose.msra.mxu0 0.0
      %1146 = vmatpush.xpose.msra.mxu0 0.0
      %1147 = vmatpush.xpose.msra.mxu0 0.0
      %1148 = vmatpush.xpose.msra.mxu0 0.0
      %1149 = vmatpush.xpose.msra.mxu0 0.0
      %1150 = vmatpush.xpose.msra.mxu0 0.0
      %1151 = vmatpush.xpose.msra.mxu0 0.0
      %1152 = vmatpush.xpose.msra.mxu0 0.0
      %1153 = vmatpush.xpose.msra.mxu0 0.0
      %1154 = vmatpush.xpose.msra.mxu0 0.0
      %1155 = vmatpush.xpose.msra.mxu0 0.0
      %1156 = vmatpush.xpose.msra.mxu0 0.0
      %1157 = vmatpush.xpose.msra.mxu0 0.0
      %1158 = vmatpush.xpose.msra.mxu0 0.0
      %1159 = vmatpush.xpose.msra.mxu0 0.0
      %1160 = vmatpush.xpose.msra.mxu0 %v1143
      %1161 = vmatmul.f32.gmra.mxu0 %v1114
      %v1162 = vpop.f32.mrf.mxu0
      %v1163 = vadd.f32 0.0, %v1162
      %1164 = vmatmul.f32.gmra.mxu0 %v1117
      %v1165 = vpop.f32.mrf.mxu0
      %v1166 = vadd.f32 0.0, %v1165
      %1167 = vmatmul.f32.gmra.mxu0 %v1120
      %v1168 = vpop.f32.mrf.mxu0
      %v1169 = vadd.f32 0.0, %v1168
      %1170 = vmatmul.f32.gmra.mxu0 %v1123
      %v1171 = vpop.f32.mrf.mxu0
      %v1172 = vadd.f32 0.0, %v1171
      %1173 = vmatmul.f32.gmra.mxu0 %v1126
      %v1174 = vpop.f32.mrf.mxu0
      %v1175 = vadd.f32 0.0, %v1174
      %1176 = vmatmul.f32.gmra.mxu0 %v1129
      %v1177 = vpop.f32.mrf.mxu0
      %v1178 = vadd.f32 0.0, %v1177
      %1179 = vmatmul.f32.gmra.mxu0 %v1132
      %v1180 = vpop.f32.mrf.mxu0
      %v1181 = vadd.f32 0.0, %v1180
      %1182 = vmatmul.f32.gmra.mxu0 %v1135
      %v1183 = vpop.f32.mrf.mxu0
      %v1184 = vadd.f32 0.0, %v1183
      %1185 = vmatmul.f32.gmra.mxu0 %v1138
      %v1186 = vpop.f32.mrf.mxu0
      %v1187 = vadd.f32 0.0, %v1186
      %1188 = vmatmul.f32.gmra.mxu0 %v1141
      %v1189 = vpop.f32.mrf.mxu0
      %v1190 = vadd.f32 0.0, %v1189
      %1191 = vdwg.mxu0
      %s1192 = scalar_lea.vmem %s4, 80
      %v1193 = vld [vmem:[%s1192] sm:$0xff]
      %v1194 = vld [vmem:[%s1192 + $0x8] sm:$0xff]
      %v1195 = vld [vmem:[%s1192 + $0x10] sm:$0xff]
      %v1196 = vld [vmem:[%s1192 + $0x18] sm:$0xff]
      %v1197 = vld [vmem:[%s1192 + $0x20] sm:$0xff]
      %v1198 = vld [vmem:[%s1192 + $0x28] sm:$0xff]
      %v1199 = vld [vmem:[%s1192 + $0x30] sm:$0xff]
      %v1200 = vld [vmem:[%s1192 + $0x38] sm:$0xff]
      %v1201 = vld [vmem:[%s1192 + $0x40] sm:$0xff]
      %v1202 = vld [vmem:[%s1192 + $0x48] sm:$0x7]
      %v1203 = vmul.f32 %v1163, %v1193
      %v1204 = vmul.f32 %v1166, %v1194
      %v1205 = vmul.f32 %v1169, %v1195
      %v1206 = vmul.f32 %v1172, %v1196
      %v1207 = vmul.f32 %v1175, %v1197
      %v1208 = vmul.f32 %v1178, %v1198
      %v1209 = vmul.f32 %v1181, %v1199
      %v1210 = vmul.f32 %v1184, %v1200
      %v1211 = vmul.f32 %v1187, %v1201
      %v1212 = vmul.f32 %v1190, %v1202
      %s1213 = scalar_lea.vmem %s224, 80
      %1214 = vst.msk [vmem:[%s1213] sm:$0xff] %vm316, %v1203
      %1215 = vst.msk [vmem:[%s1213 + $0x8] sm:$0xff] %vm316, %v1204
      %1216 = vst.msk [vmem:[%s1213 + $0x10] sm:$0xff] %vm316, %v1205
      %1217 = vst.msk [vmem:[%s1213 + $0x18] sm:$0xff] %vm316, %v1206
      %1218 = vst.msk [vmem:[%s1213 + $0x20] sm:$0xff] %vm316, %v1207
      %1219 = vst.msk [vmem:[%s1213 + $0x28] sm:$0xff] %vm316, %v1208
      %1220 = vst.msk [vmem:[%s1213 + $0x30] sm:$0xff] %vm316, %v1209
      %1221 = vst.msk [vmem:[%s1213 + $0x38] sm:$0xff] %vm316, %v1210
      %1222 = vst.msk [vmem:[%s1213 + $0x40] sm:$0xff] %vm316, %v1211
      %1223 = vst.msk [vmem:[%s1213 + $0x48] sm:$0x7] %vm749, %v1212
      %p1224 = scmp.lt.s32.totalorder %s16, 1
      %s1225 = scalar_select %p1224, %s16, 1
      %s1226 = smul.addr %s1225, 20
      %s1227 = smul.addr %s1226, 8
      %s1228 = scalar_lea.vmem %s5, %s1227
      // Predicated region
      $region41: #{spatial_attention_forward.1} parent=39 // pred_check
        %p1229 = pneg %p144
      $region42: #{spatial_attention_forward.1} parent=39 // pred_check_branch
        %1231 = sbr.rel (%p1229) target = $region44
      $region43: #{spatial_attention_forward.1} parent=39 // pred_region
        _
      $region44: #{spatial_attention_forward.1} parent=39 // pred_fallthru
        _
    $region40: #{spatial_attention_forward.1} parent=5 // pred_fallthru
      _
    %p1232 = scmp.le.s32.totalorder 2, %s11
    // Predicated region
    $region45: #{spatial_attention_forward.1} parent=5 // pred_check
      %p1233 = pneg %p1232
    $region46: #{spatial_attention_forward.1} parent=5 // pred_check_branch
      %1235 = sbr.rel (%p1233) target = $region48
    $region47: #{spatial_attention_forward.1} parent=5 // pred_region
      %s1236 = ssub.s32 %s11, 2
      // Predicated region
      $region49: #{spatial_attention_forward.1} parent=47 // pred_check
        %p1237 = pneg %p150
      $region50: #{spatial_attention_forward.1} parent=47 // pred_check_branch
        %1239 = sbr.rel (%p1237) target = $region52
      $region51: #{spatial_attention_forward.1} parent=47 // pred_region
        %p1240 = scmp.lt.s32.totalorder %s17, 1
        %s1241 = scalar_select %p1240, %s17, 1
        %s1242 = smul.addr %s1241, 20
        %s1243 = smul.addr %s1242, 8
        %s1244 = scalar_lea.vmem %s5, %s1243
      $region52: #{spatial_attention_forward.1} parent=47 // pred_fallthru
        _
    $region48: #{spatial_attention_forward.1} parent=5 // pred_fallthru
      _
  $region6: #{spatial_attention_forward.1} parent=0 // loop_footer
    %s15 = sadd.s32 1, %s11
  $region7: #{spatial_attention_forward.1} parent=0 // loop_footer_branch
    %10 = sbr.rel target = $region3
  $region8: #{spatial_attention_forward.1} parent=0 // loop_exit
    _

</llo_original>
